<compile_context>
chip_gen: v7x
topology: tpu7x:2x2x1
jax: 0.10.0
libtpu: 0.0.40
codegen_flags: <defaults>
</compile_context>

<pallas_src>
import jax
import jax.numpy as jnp
from jax.experimental import pallas as pl
from jax.experimental.pallas import tpu as pltpu  # noqa: F401  (TPU backend)


def _model1_kernel(x_ref, wb_ref, yz_ref, out_ref):
    # x:  (B, 2)      float32
    # wb: (3, OUT)    rows 0..1 = W (in-major), row 2 = bias
    # yz: (2, B, OUT) stacked y and z
    # out:(2, B, OUT) stacked y1 and z1
    x = x_ref[...]                     # (B, 2)
    wb = wb_ref[...]                   # (3, OUT)

    w0 = wb[0:1, :]                    # (1, OUT)
    w1 = wb[1:2, :]                    # (1, OUT)
    b = wb[2:3, :]                     # (1, OUT)

    # VPU path: two broadcasted multiplies + adds (no MXU involvement).
    h = x[:, 0:1] * w0 + x[:, 1:2] * w1 + b          # (B, OUT)

    # Single stacked store: (1, B, OUT) broadcast over the stacked axis.
    out_ref[...] = h[None, :, :] + yz_ref[...]


def model1_forward(x, w, b, y, z):
    """x: (B, IN=2), w: (IN, OUT), b: (OUT,), y/z: (B, OUT) -> (y1, z1)."""
    B = x.shape[0]
    OUT = w.shape[1]

    # Pack weight+bias and y/z in the wrapper (cheap, done at trace time).
    wb = jnp.concatenate([w, b.reshape(1, OUT)], axis=0).astype(jnp.float32)  # (3, OUT)
    yz = jnp.stack([y, z], axis=0).astype(jnp.float32)                        # (2, B, OUT)

    def full(shape):
        return pl.BlockSpec(shape, lambda *_: (0,) * len(shape))

    out = pl.pallas_call(
        _model1_kernel,
        out_shape=jax.ShapeDtypeStruct((2, B, OUT), jnp.float32),
        grid=(),
        in_specs=[full(x.shape), full(wb.shape), full(yz.shape)],
        out_specs=full((2, B, OUT)),
    )(x.astype(jnp.float32), wb, yz)

    return out[0], out[1]


if __name__ == "__main__":
    B, IN, OUT = 8, 2, 10

    # Deterministic parameter init (PyTorch Linear default: U(-k, k), k=1/sqrt(IN))
    key = jax.random.PRNGKey(0)
    kw, kb, kx, ky, kz = jax.random.split(key, 5)
    bound = 1.0 / jnp.sqrt(jnp.float32(IN))
    W = jax.random.uniform(kw, (IN, OUT), jnp.float32, -bound, bound)
    bias = jax.random.uniform(kb, (OUT,), jnp.float32, -bound, bound)

    x = jax.random.normal(kx, (B, IN), jnp.float32)
    y = jax.random.normal(ky, (B, OUT), jnp.float32)
    z = jax.random.normal(kz, (B, OUT), jnp.float32)

    y1, z1 = model1_forward(x, W, bias, y, z)
    jax.block_until_ready((y1, z1))

    # Reference check in plain JAX
    h_ref = x @ W + bias
    assert jnp.allclose(y1, h_ref + y, atol=1e-5)
    assert jnp.allclose(z1, h_ref + z, atol=1e-5)

    print("KERNEL_OK")
</pallas_src>

<mosaic_0001>
module attributes {stable_mosaic.version = 11 : i64} {
  func.func @_model1_kernel(%arg0: memref<8x2xf32, #tpu.memory_space<vmem>>, %arg1: memref<3x10xf32, #tpu.memory_space<vmem>>, %arg2: memref<2x8x10xf32, #tpu.memory_space<vmem>>, %arg3: memref<2x8x10xf32, #tpu.memory_space<vmem>>) attributes {dimension_semantics = [], scalar_prefetch = 0 : i64, scratch_operands = 0 : i64, tpu.core_type = #tpu.core_type<tc>} {
    %c0 = arith.constant 0 : index
    %c0_0 = arith.constant 0 : index
    %0 = vector.load %arg0[%c0, %c0_0] : memref<8x2xf32, #tpu.memory_space<vmem>>, vector<8x2xf32>
    %c0_1 = arith.constant 0 : index
    %c0_2 = arith.constant 0 : index
    %1 = vector.load %arg1[%c0_1, %c0_2] : memref<3x10xf32, #tpu.memory_space<vmem>>, vector<3x10xf32>
    %2 = vector.extract_strided_slice %1 {offsets = [0, 0], sizes = [1, 10], strides = [1, 1]} : vector<3x10xf32> to vector<1x10xf32>
    %3 = vector.extract_strided_slice %1 {offsets = [1, 0], sizes = [1, 10], strides = [1, 1]} : vector<3x10xf32> to vector<1x10xf32>
    %4 = vector.extract_strided_slice %1 {offsets = [2, 0], sizes = [1, 10], strides = [1, 1]} : vector<3x10xf32> to vector<1x10xf32>
    %5 = vector.extract_strided_slice %0 {offsets = [0, 0], sizes = [8, 1], strides = [1, 1]} : vector<8x2xf32> to vector<8x1xf32>
    %6 = vector.broadcast %5 : vector<8x1xf32> to vector<8x10xf32>
    %7 = vector.broadcast %2 : vector<1x10xf32> to vector<8x10xf32>
    %8 = arith.mulf %6, %7 : vector<8x10xf32>
    %9 = vector.extract_strided_slice %0 {offsets = [0, 1], sizes = [8, 1], strides = [1, 1]} : vector<8x2xf32> to vector<8x1xf32>
    %10 = vector.broadcast %9 : vector<8x1xf32> to vector<8x10xf32>
    %11 = vector.broadcast %3 : vector<1x10xf32> to vector<8x10xf32>
    %12 = arith.mulf %10, %11 : vector<8x10xf32>
    %13 = arith.addf %8, %12 : vector<8x10xf32>
    %14 = vector.broadcast %4 : vector<1x10xf32> to vector<8x10xf32>
    %15 = arith.addf %13, %14 : vector<8x10xf32>
    %16 = vector.shape_cast %15 : vector<8x10xf32> to vector<1x8x10xf32>
    %c0_3 = arith.constant 0 : index
    %c0_4 = arith.constant 0 : index
    %c0_5 = arith.constant 0 : index
    %17 = vector.load %arg2[%c0_3, %c0_4, %c0_5] : memref<2x8x10xf32, #tpu.memory_space<vmem>>, vector<2x8x10xf32>
    %18 = vector.broadcast %16 : vector<1x8x10xf32> to vector<2x8x10xf32>
    %19 = arith.addf %18, %17 : vector<2x8x10xf32>
    %c0_6 = arith.constant 0 : index
    %c0_7 = arith.constant 0 : index
    %c0_8 = arith.constant 0 : index
    %20 = vector.load %arg3[%c0_6, %c0_7, %c0_8] : memref<2x8x10xf32, #tpu.memory_space<vmem>>, vector<2x8x10xf32>
    tpu.vector_store %arg3[%c0_6, %c0_7, %c0_8], %19 {strides = array<i32>} : memref<2x8x10xf32, #tpu.memory_space<vmem>>, vector<2x8x10xf32>,
    return
  }
}

</mosaic_0001>

<llo_original>
// kernel: tpu_custom_call.1
$region0: #{tpu_custom_call.1}
  #allocation0 [shape = 'u32[]', space=smem, size = 0x4, offset = 0x4, fixed_abs, tag = 'smem constant byte address 0x4 - core index']
  #allocation1 [shape = 'u32[144,128]{1,0:T(1,128)}', space=vmem, size = 0x12000, scoped, tag = 'internal scratch']
  %s0 = inlined_call_operand.vmem [shape: f32[8,2], index: 0, kind: input, shape index: {}]
  %s1 = inlined_call_operand.hbm [shape: f32[3,10], index: 1, kind: input, shape index: {}]
  %s2 = inlined_call_operand.vmem [shape: f32[2,8,10], index: 2, kind: input, shape index: {}]
  %s3 = inlined_call_operand.hbm [shape: f32[2,8,10], index: 3, kind: output, shape index: {}]
  %s4 = sld [smem:[#allocation0]]
  $region26: #{tpu_custom_call.1} parent=0
    _
  %s6 = ssub.s32 1, %s4
  %s7 = scalar_select 0, %s6, %s4
  $region1: #{tpu_custom_call.1} parent=0
    #allocation2 [shape = 'u8[2048]{0}', space=vmem, size = 0x800, scoped, tag = 'input window, operand 1, single buffered']
    #allocation3 [shape = 's32[1]{0}', space=sflag, size = 0x4, scoped, tag = 'scoped memory for tpu_custom_call.1']
    #allocation4 [shape = 's32[1]{0}', space=sflag, size = 0x4, scoped, tag = 'scoped memory for tpu_custom_call.1']
    #allocation5 [shape = 'u8[8192]{0}', space=vmem, size = 0x2000, scoped, tag = 'output window, operand 0, single buffered']
    %8 = vsyncpa [#allocation3], 0
    %9 = vsyncpa [#allocation4], 0
    // Predicated region
    $region2: #{tpu_custom_call.1} parent=1 // pred_check
      _
    $region3: #{tpu_custom_call.1} parent=1 // pred_check_branch
      %11 = sbr.rel (0) target = $region5
    $region4: #{tpu_custom_call.1} parent=1 // pred_region
      _
    $region5: #{tpu_custom_call.1} parent=1 // pred_fallthru
      _
    // Predicated region
    $region6: #{tpu_custom_call.1} parent=1 // pred_check
      _
    $region7: #{tpu_custom_call.1} parent=1 // pred_check_branch
      %13 = sbr.rel (0) target = $region9
    $region8: #{tpu_custom_call.1} parent=1 // pred_region
      %s15 = ssub.s32 64, 64
      %16 = vsyncadd [#allocation3], %s15
      %s18 = sshll.u32 [#allocation2], 4
      %s19 = int_to_ptr.vmem [resolvable:$true] %s18
      %21 = dma.hbm_to_vmem [thread:$0]  %s1, 64, %s19, [#allocation3]
    $region9: #{tpu_custom_call.1} parent=1 // pred_fallthru
      _
    // Predicated region
    $region10: #{tpu_custom_call.1} parent=1 // pred_check
      _
    $region11: #{tpu_custom_call.1} parent=1 // pred_check_branch
      %23 = sbr.rel (0) target = $region13
    $region12: #{tpu_custom_call.1} parent=1 // pred_region
      _
    $region13: #{tpu_custom_call.1} parent=1 // pred_fallthru
      _
    // Predicated region
    $region14: #{tpu_custom_call.1} parent=1 // pred_check
      _
    $region15: #{tpu_custom_call.1} parent=1 // pred_check_branch
      %25 = sbr.rel (0) target = $region17
    $region16: #{tpu_custom_call.1} parent=1 // pred_region
      %26 = dma.done [#allocation3], 64
    $region17: #{tpu_custom_call.1} parent=1 // pred_fallthru
      _
    %v27 = vld [vmem:[%s0] sm:$0xff]
    %v28 = vld [vmem:[#allocation2] sm:$0x7]
    %30 = vset.pattern.permute.xlu0 0
    %31 = vperm.xlu0 %30, %v27
    %v32 = vpop.permute.xlu0 %31
    %v34 = vlaneseq
    %v35 = vshrl.u32 %v34, 7
    %v36 = vsub.s32 0, %v35
    %v37 = vrot.slane %v28, %v36
    %v38 = vmul.f32 %v32, %v37
    %39 = vset.pattern.permute.xlu0 1
    %40 = vperm.xlu0 %39, %v27
    %v41 = vpop.permute.xlu0 %40
    %v43 = vlaneseq
    %v44 = vshrl.u32 %v43, 7
    %v45 = vsub.s32 1, %v44
    %v46 = vrot.slane %v28, %v45
    %v47 = vmul.f32 %v41, %v46
    %v48 = vadd.f32 %v38, %v47
    %v49 = vlaneseq
    %v50 = vshrl.u32 %v49, 7
    %v51 = vsub.s32 2, %v50
    %v52 = vrot.slane %v28, %v51
    %v53 = vadd.f32 %v48, %v52
    %v54 = vld [vmem:[%s2] sm:$0xff]
    %v55 = vld [vmem:[%s2 + $0x8] sm:$0xff]
    %v56 = vadd.f32 %v53, %v54
    %v57 = vadd.f32 %v53, %v55
    %vm58 = vcmask 80896
    %59 = vst.msk [vmem:[#allocation5] sm:$0xff] %vm58, %v56
    %60 = vst.msk [vmem:[#allocation5 + $0x8] sm:$0xff] %vm58, %v57
    // Predicated region
    $region18: #{tpu_custom_call.1} parent=1 // pred_check
      _
    $region19: #{tpu_custom_call.1} parent=1 // pred_check_branch
      %62 = sbr.rel (0) target = $region21
    $region20: #{tpu_custom_call.1} parent=1 // pred_region
      %s64 = ssub.s32 256, 256
      %65 = vsyncadd [#allocation4], %s64
      %s66 = sshll.u32 [#allocation5], 4
      %s67 = int_to_ptr.vmem [resolvable:$true] %s66
      %72 = dma.vmem_to_hbm [thread:$0]  %s67, 256, %s3, [#allocation4], 128, 128, 8
    $region21: #{tpu_custom_call.1} parent=1 // pred_fallthru
      _
    // Predicated region
    $region22: #{tpu_custom_call.1} parent=1 // pred_check
      _
    $region23: #{tpu_custom_call.1} parent=1 // pred_check_branch
      %74 = sbr.rel (0) target = $region25
    $region24: #{tpu_custom_call.1} parent=1 // pred_region
      %75 = dma.done [#allocation4], 256
    $region25: #{tpu_custom_call.1} parent=1 // pred_fallthru
      _
    %76 = vsyncpa [#allocation3], 1
    %77 = vsyncpa [#allocation4], 1

</llo_original>
